<compile_context>
chip_gen: v7x
topology: tpu7x:2x2x1
jax: 0.10.0
libtpu: 0.0.40
codegen_flags: <defaults>
</compile_context>

<pallas_src>
import functools

import jax
import jax.numpy as jnp
from jax import lax
from jax.experimental import pallas as pl
from jax.experimental.pallas import tpu as pltpu

INF = 1e12
EPS = 1e-12
LANE = 128   # lane width / padding quantum


def _rup(x, m):
    return (x + m - 1) // m * m


def _pad2(x, rows, cols):
    return jnp.pad(x, ((0, rows - x.shape[0]), (0, cols - x.shape[1])))


def _pick_row_tile(rows):
    for t in (2048, 1024, 512, 256, 128, 64, 32, 16, 8):
        if rows % t == 0:
            return t
    return rows


# ----------------------------------------------------------------------------
# chip-aware plan (batch blocking / elementwise dtype / VMEM budget)
# ----------------------------------------------------------------------------
def make_plan(num_batch_blocks=None):
    kind = ""
    try:
        kind = jax.devices()[0].device_kind.lower()
    except Exception:
        pass
    is_v7 = "v7" in kind
    is_v5e = ("v5 lite" in kind) or ("v5e" in kind) or ("v5lite" in kind)
    nb = num_batch_blocks if num_batch_blocks is not None else (2 if is_v7 else 1)
    return dict(
        nb=nb,                               # 2 blocks on v7x (2 TCs), else 1
        attn_bf16=not is_v5e,                # v5e has no bf16 VPU/EUP
        vmem_limit=(48 if is_v7 else 64) * 1024 * 1024,
    )


# ----------------------------------------------------------------------------
# synthetic "logical" parameters (pre-transposed to (in_features, out_features))
# ----------------------------------------------------------------------------
def init_params(key, vocab_size, embed_size, hidden_size, enc_hidden_size):
    ks = jax.random.split(key, 18)
    w = lambda k, shape: jax.random.normal(k, shape, jnp.float32) * 0.1
    H, E, EMB, V = hidden_size, enc_hidden_size, embed_size, vocab_size
    A = H  # attention projection width (assumed = decoder hidden size)
    return {
        # fc_dec_input: Linear(E + EMB, EMB); prev_enc_context is None here,
        # so the E-half multiplies zeros -> dropped entirely.
        "W_fc_e": w(ks[0], (EMB, EMB)), "b_fc": w(ks[1], (1, EMB)),
        # LSTM(EMB, H), PyTorch gate order (i, f, g, o)
        "W_ih": w(ks[2], (EMB, 4 * H)), "W_hh": w(ks[3], (H, 4 * H)),
        "b_ih": w(ks[4], (1, 4 * H)), "b_hh": w(ks[5], (1, 4 * H)),
        # AttentionModule(H, 2H, E): additive v.tanh(Wq[h;c] + Wm m) assumed
        "Wq_h": w(ks[6], (H, A)), "Wq_c": w(ks[7], (H, A)),
        "Wm": w(ks[8], (E, A)), "v_attn": w(ks[9], (1, A)),
        # pre_out: Linear(H + E, EMB, bias=False), split over [h | ctx]
        "W_pre_h": w(ks[10], (H, EMB)), "W_pre_c": w(ks[11], (E, EMB)),
        # out: tied embedding weight (V, EMB) used transposed, bias=False
        "W_out": w(ks[12], (EMB, V)),
        # ptr: Linear(EMB + 2H + E, 1) split into row-vector pieces
        "W_ptr_e": w(ks[13], (1, EMB)), "W_ptr_h1": w(ks[14], (1, H)),
        "W_ptr_h2": w(ks[15], (1, H)), "W_ptr_c": w(ks[16], (1, E)),
        "b_ptr": w(ks[17], (1, 1)),
    }


# ----------------------------------------------------------------------------
# one-time weight padding / fusion (incl. w_out padded to max extended vocab)
# ----------------------------------------------------------------------------
def prepare_decoder_weights(p, max_ext_vocab_size, vocab_tile=1024):
    EMB = p["W_fc_e"].shape[0]
    H = p["W_hh"].shape[0]
    A = p["Wm"].shape[1]
    E = p["Wm"].shape[0]
    V = p["W_out"].shape[1]
    embp, hp, ap, ep = _rup(EMB, LANE), _rup(H, LANE), _rup(A, LANE), _rup(E, LANE)
    maxv = max(max_ext_vocab_size, V)
    VT = min(_rup(maxv, LANE), _rup(vocab_tile, LANE))   # vocab tile (lanes)
    extvp = _rup(maxv, VT)                               # padded extended vocab
    bf = jnp.bfloat16

    def gate_pad(w):  # (in, 4H) -> (in, 4*hp): each gate in its own lane tile(s)
        gs = [jnp.pad(w[:, k * H:(k + 1) * H], ((0, 0), (0, hp - H))) for k in range(4)]
        return jnp.concatenate(gs, axis=1)

    # fused [fc_dec_input | ptr_e] on LHS = embedded
    w_emb_f = jnp.concatenate(
        [_pad2(p["W_fc_e"], embp, embp), _pad2(p["W_ptr_e"].T, embp, LANE)],
        axis=1).astype(bf)
    # fused [attn query | pre_out | ptr_h1] on LHS = h1
    w_h1_f = jnp.concatenate(
        [_pad2(p["Wq_h"], hp, ap), _pad2(p["W_pre_h"], hp, embp),
         _pad2(p["W_ptr_h1"].T, hp, LANE)], axis=1).astype(bf)
    # fused [attn query | ptr_h2] on LHS = c1
    w_c1_f = jnp.concatenate(
        [_pad2(p["Wq_c"], hp, ap), _pad2(p["W_ptr_h2"].T, hp, LANE)],
        axis=1).astype(bf)
    # fused [pre_out | ptr_c] on LHS = enc_context
    w_ctx_f = jnp.concatenate(
        [_pad2(p["W_pre_c"], ep, embp), _pad2(p["W_ptr_c"].T, ep, LANE)],
        axis=1).astype(bf)

    return dict(
        dims=dict(EMB=EMB, H=H, A=A, E=E, V=V,
                  embp=embp, hp=hp, ap=ap, ep=ep, extvp=extvp, VT=VT),
        w_emb_f=w_emb_f,
        b_fc=_pad2(p["b_fc"], 1, embp),
        w_ih=_pad2(gate_pad(p["W_ih"]), embp, 4 * hp).astype(bf),
        w_hh=_pad2(gate_pad(p["W_hh"]), hp, 4 * hp).astype(bf),
        b_lstm=_pad2(gate_pad(p["b_ih"] + p["b_hh"]), 1, 4 * hp),
        w_h1_f=w_h1_f, w_c1_f=w_c1_f, w_ctx_f=w_ctx_f,
        wm=_pad2(p["Wm"], ep, ap).astype(bf),
        v_attn=_pad2(p["v_attn"], 1, ap),
        w_out=_pad2(p["W_out"], embp, extvp).astype(bf),   # padded ONCE, not per step
        b_ptr=p["b_ptr"],
    )


# ----------------------------------------------------------------------------
# per-sequence precompute: padded encoder states / masks / indices + Wm @ enc
# ----------------------------------------------------------------------------
def enc_proj_kernel(enc_ref, wm_ref, out_ref):
    out_ref[...] = jnp.dot(enc_ref[...], wm_ref[...],
                           preferred_element_type=jnp.float32).astype(out_ref.dtype)


def precompute_encoder_memory(prepped, plan, encoder_hiddens,
                              input_mask, input_node_mask, encoder_word_idx):
    """Runs once per input sequence; reused for every decode step."""
    d = prepped["dims"]
    ep, ap = d["ep"], d["ap"]
    nb = plan["nb"]
    f32 = jnp.float32

    enc = jnp.transpose(encoder_hiddens, (1, 0, 2)).astype(f32)  # (B, S, E)
    B, S, E = enc.shape
    assert encoder_word_idx.shape[1] == S  # TODO(synk): copy-index len == src len assumed
    B_pad = _rup(B, 8 * nb)
    S8 = _rup(S, 8)                        # sublane-only padding for the seq axis

    enc_pad = jnp.pad(enc, ((0, B_pad - B), (0, S8 - S), (0, ep - E))
                      ).astype(jnp.bfloat16)                     # (B_pad, S8, ep)
    pad_bs = lambda x: jnp.pad(x, ((0, B_pad - x.shape[0]), (0, S8 - x.shape[1])))
    mask_p = pad_bs(input_mask.astype(f32))
    nmask_p = pad_bs(input_node_mask.astype(f32))
    idx_p = pad_bs(encoder_word_idx.astype(jnp.int32))

    # attention memory projection Wm @ enc, row-tiled (memory-bound matmul)
    rows = B_pad * S8
    tr = _pick_row_tile(rows)
    m_proj = pl.pallas_call(
        enc_proj_kernel,
        out_shape=jax.ShapeDtypeStruct((rows, ap), jnp.bfloat16),
        grid_spec=pltpu.PrefetchScalarGridSpec(
            num_scalar_prefetch=0, grid=(rows // tr,),
            in_specs=[pl.BlockSpec((tr, ep), lambda i: (i, 0)),
                      pl.BlockSpec((ep, ap), lambda i: (0, 0))],
            out_specs=pl.BlockSpec((tr, ap), lambda i: (i, 0))),
        compiler_params=pltpu.CompilerParams(
            dimension_semantics=("parallel",),
            vmem_limit_bytes=plan["vmem_limit"]),
    )(enc_pad.reshape(rows, ep), prepped["wm"])

    return dict(B=B, S=S, B_pad=B_pad, S8=S8,
                enc=enc_pad, mproj=m_proj.reshape(B_pad, S8, ap),
                mask=mask_p, nmask=nmask_p, idx=idx_p)


# ----------------------------------------------------------------------------
# per-step kernel A: LSTM + attention + pointer gate (at v==0) and the
# vocab-tiled tied output projection with streaming (online) softmax stats.
# grid = (batch_blocks, vocab_tiles), semantics ("parallel", "arbitrary").
# ----------------------------------------------------------------------------
def decoder_core_kernel(
    # per-batch data
    emb_ref, h0_ref, c0_ref, enc_ref, mproj_ref, mask_ref, nmask_ref,
    # fused / padded weights
    w_emb_ref, b_fc_ref, w_ih_ref, w_hh_ref, b_lstm_ref,
    w_h1_ref, w_c1_ref, w_ctx_ref, v_attn_ref, w_out_ref, b_ptr_ref,
    # outputs
    logits_ref, h1_ref, c1_ref, attn_ref, ctx_ref, wcopy_ref, stats_ref,
    # scratch
    oemb_ref,
    *, hp, embp, ap, vocab_size, vt, attn_bf16):
    f32, bf16 = jnp.float32, jnp.bfloat16
    v_id = pl.program_id(1)

    def sigmoid(x):                       # one EUP tanh + two VPU ops
        return 0.5 * jnp.tanh(0.5 * x) + 0.5

    def masked_softmax(logits):           # exact reciprocal (eval parity)
        m = jnp.max(logits, axis=-1, keepdims=True)
        e = jnp.exp(logits - m)
        return e * pl.reciprocal(jnp.sum(e, axis=-1, keepdims=True))

    @pl.when(v_id == 0)
    def _core():
        emb = emb_ref[...].astype(bf16)   # (TB, embp)
        h0 = h0_ref[...].astype(bf16)     # (TB, hp)
        c0 = c0_ref[...]                  # (TB, hp) f32, elementwise only

        # fc_dec_input (zero prev_enc_context half dropped) fused with ptr_e
        emb_f = jnp.dot(emb, w_emb_ref[...], preferred_element_type=f32)
        dec_in = emb_f[:, :embp] + b_fc_ref[...]
        ptr_acc = emb_f[:, embp:]         # (TB, 128)

        # single-step LSTM; dropouts are identity in eval mode
        gates = (jnp.dot(dec_in.astype(bf16), w_ih_ref[...], preferred_element_type=f32)
                 + jnp.dot(h0, w_hh_ref[...], preferred_element_type=f32)
                 + b_lstm_ref[...])
        i_g = sigmoid(gates[:, 0 * hp:1 * hp])
        f_g = sigmoid(gates[:, 1 * hp:2 * hp])
        g_g = jnp.tanh(gates[:, 2 * hp:3 * hp])
        o_g = sigmoid(gates[:, 3 * hp:4 * hp])
        c1 = f_g * c0 + i_g * g_g          # padded lanes stay exactly 0
        h1 = o_g * jnp.tanh(c1)

        # fused projections sharing h1 / c1: [attn query | pre_out | ptr]
        h1_f = jnp.dot(h1.astype(bf16), w_h1_ref[...], preferred_element_type=f32)
        c1_f = jnp.dot(c1.astype(bf16), w_c1_ref[...], preferred_element_type=f32)
        q_proj = h1_f[:, :ap] + c1_f[:, :ap]
        pre_h = h1_f[:, ap:ap + embp]
        ptr_acc = ptr_acc + h1_f[:, ap + embp:] + c1_f[:, ap:]

        # additive attention (Wm @ enc is precomputed per sequence)
        if attn_bf16:                     # v6e/v7x: bf16 tanh/energy, f32 accumulate
            t = jnp.tanh(q_proj.astype(bf16)[:, None, :] + mproj_ref[...])
            energy = jnp.sum((t * v_attn_ref[...].astype(bf16)).astype(f32), axis=-1)
        else:                             # v5e: no bf16 VPU/EUP -> stay f32
            t = jnp.tanh(q_proj[:, None, :] + mproj_ref[...].astype(f32))
            energy = jnp.sum(t * v_attn_ref[...], axis=-1)      # (TB, S8)

        amask = mask_ref[...]
        attn = masked_softmax(amask * energy - (1.0 - amask) * INF)

        # enc_context = attn @ encoder_hiddens on the MXU
        ctx = jnp.einsum("bqs,bse->bqe", attn[:, None, :].astype(bf16), enc_ref[...],
                         preferred_element_type=f32)[:, 0, :]    # (TB, ep)

        ctx_f = jnp.dot(ctx.astype(bf16), w_ctx_ref[...], preferred_element_type=f32)
        pre_c = ctx_f[:, :embp]
        ptr_acc = ptr_acc + ctx_f[:, embp:]

        out_embed = jnp.tanh(pre_h + pre_c)                      # (TB, embp)

        # pointer gate: single cross-lane reduce over the fused ptr segments
        prob_ptr = sigmoid(jnp.sum(ptr_acc, axis=-1, keepdims=True) + b_ptr_ref[0, 0])

        # copy weights over source positions (node-masked softmax)
        nmask = nmask_ref[...]
        ptr_dist = masked_softmax(nmask * energy - (1.0 - nmask) * INF)

        # stash / emit per-row results (resident across the vocab axis)
        oemb_ref[...] = out_embed.astype(bf16)
        h1_ref[...] = h1
        c1_ref[...] = c1
        attn_ref[...] = attn
        ctx_ref[...] = ctx
        wcopy_ref[...] = prob_ptr * ptr_dist
        stats_ref[...] = jnp.concatenate(
            [jnp.full_like(prob_ptr, -1e30),              # running max
             jnp.zeros_like(prob_ptr),                    # running sum-exp
             prob_ptr,                                    # prob of copying
             jnp.zeros((prob_ptr.shape[0], 5), f32)], axis=-1)

    # vocab-tiled tied output projection + online softmax statistics
    lt = jnp.dot(oemb_ref[...], w_out_ref[...], preferred_element_type=f32)  # (TB, VT)
    col = v_id * vt + lax.broadcasted_iota(jnp.int32, (1, vt), 1)
    lt_m = jnp.where(col < vocab_size, lt, -1e30)        # gen softmax over real vocab only
    m_old = stats_ref[:, 0:1]
    l_old = stats_ref[:, 1:2]
    m_new = jnp.maximum(m_old, jnp.max(lt_m, axis=-1, keepdims=True))
    l_new = (l_old * jnp.exp(m_old - m_new)
             + jnp.sum(jnp.exp(lt_m - m_new), axis=-1, keepdims=True))
    stats_ref[:, 0:1] = m_new
    stats_ref[:, 1:2] = l_new
    logits_ref[...] = lt


# ----------------------------------------------------------------------------
# per-step kernel B: finalize generation softmax, copy scatter, mixture, log.
# grid = (batch_blocks, vocab_tiles).
# ----------------------------------------------------------------------------
def decoder_output_kernel(logits_ref, stats_ref, wcopy_ref, idx_ref, out_ref,
                          *, vocab_size, vt):
    f32 = jnp.float32
    v_id = pl.program_id(1)
    m = stats_ref[:, 0:1]
    inv_l = pl.reciprocal(stats_ref[:, 1:2])              # exact: gen sums to 1
    prob_ptr = stats_ref[:, 2:3]

    col = v_id * vt + lax.broadcasted_iota(jnp.int32, (1, vt), 1)
    gen = jnp.exp(jnp.where(col < vocab_size, logits_ref[...], -1e30) - m) * inv_l

    # scatter_add of the copy distribution: compare-and-accumulate over S
    sel = jnp.where(idx_ref[...][:, :, None] == col[:, None, :],
                    wcopy_ref[...][:, :, None], 0.0)       # (TB, S8, VT)
    copy_t = jnp.sum(sel, axis=1)                          # (TB, VT)

    out_ref[...] = jnp.log((1.0 - prob_ptr) * gen + copy_t + EPS)   # log_prob=True


# ----------------------------------------------------------------------------
# per-step wrapper
# ----------------------------------------------------------------------------
def decoder_step(prepped, plan, seq, embedded, rnn_state, ext_vocab_size):
    d = prepped["dims"]
    H, E, V = d["H"], d["E"], d["V"]
    embp, hp, ap, ep = d["embp"], d["hp"], d["ap"], d["ep"]
    extvp, VT = d["extvp"], d["VT"]
    nvt = extvp // VT
    assert ext_vocab_size <= extvp

    B, B_pad, S, S8 = seq["B"], seq["B_pad"], seq["S"], seq["S8"]
    nb = plan["nb"]
    TBb = B_pad // nb
    f32 = jnp.float32

    h0 = rnn_state[0][0]
    c0 = rnn_state[1][0]
    pad_b = lambda x, cols: jnp.pad(x, ((0, B_pad - x.shape[0]), (0, cols - x.shape[1])))
    emb_p = pad_b(embedded.astype(f32), embp)     # only the per-step tensors are padded here
    h0_p = pad_b(h0.astype(f32), hp)
    c0_p = pad_b(c0.astype(f32), hp)

    dspec2 = lambda cols: pl.BlockSpec((TBb, cols), lambda b, v: (b, 0))
    dspec3 = lambda s, c: pl.BlockSpec((TBb, s, c), lambda b, v: (b, 0, 0))
    wspec = lambda shape: pl.BlockSpec(shape, lambda b, v: (0,) * len(shape))

    core = functools.partial(decoder_core_kernel, hp=hp, embp=embp, ap=ap,
                             vocab_size=V, vt=VT, attn_bf16=plan["attn_bf16"])
    core_out_shape = (
        jax.ShapeDtypeStruct((B_pad, extvp), f32),   # raw logits (vocab-tiled)
        jax.ShapeDtypeStruct((B_pad, hp), f32),      # new h
        jax.ShapeDtypeStruct((B_pad, hp), f32),      # new c
        jax.ShapeDtypeStruct((B_pad, S8), f32),      # enc_attn
        jax.ShapeDtypeStruct((B_pad, ep), f32),      # enc_context
        jax.ShapeDtypeStruct((B_pad, S8), f32),      # prob_ptr * ptr_dist
        jax.ShapeDtypeStruct((B_pad, 8), f32),       # [softmax max, softmax sum, prob_ptr]
    )
    core_outs = pl.pallas_call(
        core,
        out_shape=core_out_shape,
        grid_spec=pltpu.PrefetchScalarGridSpec(
            num_scalar_prefetch=0,
            grid=(nb, nvt),
            in_specs=[
                dspec2(embp), dspec2(hp), dspec2(hp),
                dspec3(S8, ep), dspec3(S8, ap),
                dspec2(S8), dspec2(S8),
                wspec(prepped["w_emb_f"].shape), wspec(prepped["b_fc"].shape),
                wspec(prepped["w_ih"].shape), wspec(prepped["w_hh"].shape),
                wspec(prepped["b_lstm"].shape),
                wspec(prepped["w_h1_f"].shape), wspec(prepped["w_c1_f"].shape),
                wspec(prepped["w_ctx_f"].shape), wspec(prepped["v_attn"].shape),
                pl.BlockSpec((embp, VT), lambda b, v: (0, v)),      # streamed w_out tiles
                pl.BlockSpec(memory_space=pltpu.MemorySpace.SMEM),  # b_ptr scalar
            ],
            out_specs=[
                pl.BlockSpec((TBb, VT), lambda b, v: (b, v)),
                pl.BlockSpec((TBb, hp), lambda b, v: (b, 0)),
                pl.BlockSpec((TBb, hp), lambda b, v: (b, 0)),
                pl.BlockSpec((TBb, S8), lambda b, v: (b, 0)),
                pl.BlockSpec((TBb, ep), lambda b, v: (b, 0)),
                pl.BlockSpec((TBb, S8), lambda b, v: (b, 0)),
                pl.BlockSpec((TBb, 8), lambda b, v: (b, 0)),
            ],
            scratch_shapes=[pltpu.VMEM((TBb, embp), jnp.bfloat16)]),
        compiler_params=pltpu.CompilerParams(
            dimension_semantics=("parallel", "arbitrary"),
            vmem_limit_bytes=plan["vmem_limit"]),
    )(emb_p, h0_p, c0_p, seq["enc"], seq["mproj"], seq["mask"], seq["nmask"],
      prepped["w_emb_f"], prepped["b_fc"], prepped["w_ih"], prepped["w_hh"],
      prepped["b_lstm"], prepped["w_h1_f"], prepped["w_c1_f"], prepped["w_ctx_f"],
      prepped["v_attn"], prepped["w_out"], prepped["b_ptr"])

    logits_p, h1_p, c1_p, attn_p, ctx_p, wcopy_p, stats_p = core_outs

    out_fn = functools.partial(decoder_output_kernel, vocab_size=V, vt=VT)
    out_p = pl.pallas_call(
        out_fn,
        out_shape=jax.ShapeDtypeStruct((B_pad, extvp), f32),
        grid_spec=pltpu.PrefetchScalarGridSpec(
            num_scalar_prefetch=0,
            grid=(nb, nvt),
            in_specs=[
                pl.BlockSpec((TBb, VT), lambda b, v: (b, v)),
                pl.BlockSpec((TBb, 8), lambda b, v: (b, 0)),
                dspec2(S8), dspec2(S8),
            ],
            out_specs=pl.BlockSpec((TBb, VT), lambda b, v: (b, v))),
        compiler_params=pltpu.CompilerParams(
            dimension_semantics=("parallel", "arbitrary"),
            vmem_limit_bytes=plan["vmem_limit"]),
    )(logits_p, stats_p, wcopy_p, seq["idx"])

    log_probs = out_p[:B, :ext_vocab_size]
    new_state = (h1_p[:B, :H][None], c1_p[:B, :H][None])   # back to (1, B, H)
    enc_attn = attn_p[:B, :S]
    prob_ptr = stats_p[:B, 2:3]
    enc_context = ctx_p[:B, :E]
    return log_probs, new_state, enc_attn, prob_ptr, enc_context


if __name__ == "__main__":
    B, S = 16, 24               # batch / source length
    EMB, H, E = 32, 32, 64      # embed_size, hidden_size, GRAPH_HIDDEN_SIZE
    V, EXT_V = 64, 80           # vocab_size, ext_vocab_size (with OOV slots)

    key = jax.random.PRNGKey(0)
    k_p, k_e, k_h, k_c, k_enc, k_idx = jax.random.split(key, 6)

    plan = make_plan()
    params = init_params(k_p, V, EMB, H, E)
    prepped = prepare_decoder_weights(params, max_ext_vocab_size=EXT_V)

    embedded = jax.random.normal(k_e, (B, EMB), jnp.float32)
    h0 = jax.random.normal(k_h, (1, B, H), jnp.float32)
    c0 = jax.random.normal(k_c, (1, B, H), jnp.float32)
    encoder_hiddens = jax.random.normal(k_enc, (S, B, E), jnp.float32)  # (src_len, B, E)

    lengths = jnp.concatenate([jnp.full((B // 2,), S, jnp.int32),
                               jnp.full((B - B // 2,), S - 5, jnp.int32)])
    pos = jnp.arange(S)[None, :]
    input_mask = (pos < lengths[:, None]).astype(jnp.float32)           # (B, S)
    input_node_mask = input_mask
    encoder_word_idx = jax.random.randint(k_idx, (B, S), 0, EXT_V).astype(jnp.int32)

    # one-time per input sequence (reused for every decode step)
    seq = precompute_encoder_memory(prepped, plan, encoder_hiddens,
                                    input_mask, input_node_mask, encoder_word_idx)

    outs = decoder_step(prepped, plan, seq, embedded, (h0, c0), EXT_V)
    jax.block_until_ready(outs)
    log_probs, rnn_state, enc_attn, prob_ptr, enc_context = outs
    assert log_probs.shape == (B, EXT_V)
    assert rnn_state[0].shape == (1, B, H) and rnn_state[1].shape == (1, B, H)
    assert enc_attn.shape == (B, S) and prob_ptr.shape == (B, 1) and enc_context.shape == (B, E)
    assert bool(jnp.all(jnp.isfinite(log_probs)))
    print("KERNEL_OK")
</pallas_src>

<mosaic_0001>
module attributes {stable_mosaic.version = 11 : i64} {
  func.func @enc_proj_kernel(%arg0: i32, %arg1: memref<128x128xbf16, #tpu.memory_space<vmem>>, %arg2: memref<128x128xbf16, #tpu.memory_space<vmem>>, %arg3: memref<128x128xbf16, #tpu.memory_space<vmem>>) attributes {dimension_semantics = [#tpu.dimension_semantics<parallel>], iteration_bounds = array<i64: 3>, scalar_prefetch = 0 : i64, scratch_operands = 0 : i64, tpu.core_type = #tpu.core_type<tc>, window_params = [{transform_indices = @transform_0, window_bounds = array<i64: 128, 128>}, {pipeline_mode = #tpu.pipeline_mode<synchronous>, transform_indices = @transform_1, window_bounds = array<i64: 128, 128>}, {transform_indices = @transform_2, window_bounds = array<i64: 128, 128>}]} {
    %c0 = arith.constant 0 : index
    %c0_0 = arith.constant 0 : index
    %0 = vector.load %arg1[%c0, %c0_0] : memref<128x128xbf16, #tpu.memory_space<vmem>>, vector<128x128xbf16>
    %c0_1 = arith.constant 0 : index
    %c0_2 = arith.constant 0 : index
    %1 = vector.load %arg2[%c0_1, %c0_2] : memref<128x128xbf16, #tpu.memory_space<vmem>>, vector<128x128xbf16>
    %cst = arith.constant dense<0.000000e+00> : vector<128x128xf32>
    %2 = tpu.matmul %0, %1, %cst {dimension_numbers = #tpu.dot_dimension_numbers<[1], [0], [0], [1], [0, 0, 1, 1], [], []>} : vector<128x128xbf16>, vector<128x128xbf16>, vector<128x128xf32> -> vector<128x128xf32>
    %3 = arith.truncf %2 : vector<128x128xf32> to vector<128x128xbf16>
    %c0_3 = arith.constant 0 : index
    %c0_4 = arith.constant 0 : index
    %4 = vector.load %arg3[%c0_3, %c0_4] : memref<128x128xbf16, #tpu.memory_space<vmem>>, vector<128x128xbf16>
    tpu.vector_store %arg3[%c0_3, %c0_4], %3 {strides = array<i32>} : memref<128x128xbf16, #tpu.memory_space<vmem>>, vector<128x128xbf16>,
    return
  }
  func.func @transform_0(%arg0: i32) -> (i32, i32) {
    %c0_i32 = arith.constant 0 : i32
    %c0_i32_0 = arith.constant 0 : i32
    return %arg0, %c0_i32 : i32, i32
  }
  func.func @transform_1(%arg0: i32) -> (i32, i32) {
    %c0_i32 = arith.constant 0 : i32
    %c0_i32_0 = arith.constant 0 : i32
    %c0_i32_1 = arith.constant 0 : i32
    return %c0_i32, %c0_i32_0 : i32, i32
  }
  func.func @transform_2(%arg0: i32) -> (i32, i32) {
    %c0_i32 = arith.constant 0 : i32
    %c0_i32_0 = arith.constant 0 : i32
    return %arg0, %c0_i32 : i32, i32
  }
}

</mosaic_0001>

<llo_original>
// kernel: tpu_custom_call.1
$region0: #{tpu_custom_call.1}
  #allocation0 [shape = 'u32[]', space=smem, size = 0x4, offset = 0x4, fixed_abs, tag = 'smem constant byte address 0x4 - core index']
  #allocation1 [shape = 'u32[144,128]{1,0:T(1,128)}', space=vmem, size = 0x12000, scoped, tag = 'internal scratch']
  %s0 = inlined_call_operand.hbm [shape: bf16[384,128], index: 0, kind: input, shape index: {}]
  %s1 = inlined_call_operand.hbm [shape: bf16[128,128], index: 1, kind: input, shape index: {}]
  %s2 = inlined_call_operand.hbm [shape: bf16[384,128], index: 2, kind: output, shape index: {}]
  %s3 = sld [smem:[#allocation0]]
  $region49: #{tpu_custom_call.1} parent=0
    _
  %s5 = ssub.s32 1, %s3
  %s6 = scalar_select 0, %s5, %s3
  $region1: #{tpu_custom_call.1} parent=0
    #allocation2 [shape = 'u8[65536]{0}', space=vmem, size = 0x10000, scoped, tag = 'input window, operand 0']
    #allocation3 [shape = 's32[2]{0}', space=sflag, size = 0x8, scoped, tag = 'scoped memory for tpu_custom_call.1']
    #allocation4 [shape = 's32[2]{0}', space=sflag, size = 0x8, scoped, tag = 'scoped memory for tpu_custom_call.1']
    #allocation5 [shape = 'u8[32768]{0}', space=vmem, size = 0x8000, scoped, tag = 'input window, operand 1, single buffered']
    #allocation6 [shape = 's32[1]{0}', space=sflag, size = 0x4, scoped, tag = 'scoped memory for tpu_custom_call.1']
    #allocation7 [shape = 'u8[65536]{0}', space=vmem, size = 0x10000, scoped, tag = 'output window, operand 0']
    %7 = vsyncpa [#allocation3], 0
    %s8 = scalar_lea.sflag [#allocation3], 1
    %9 = vsyncpa %s8, 0
    %10 = vsyncpa [#allocation6], 0
    %11 = vsyncpa [#allocation4], 0
    %s12 = scalar_lea.sflag [#allocation4], 1
    %13 = vsyncpa %s12, 0
    loop: start=0, step=1, limit=5
    $region2: #{tpu_custom_call.1} parent=1 // loop_pre_header
      _
    $region3: #{tpu_custom_call.1} parent=1 // loop_header
      %s15 = sphi 0, %s19
      %p16 = scmp.ge.s32.totalorder %s15, 5
      %s25 = sphi 0, %s27
      %s28 = sphi 0, %s25
      %s29 = sphi 0, %s28
      %s45 = sphi 0, %s29
      %s49 = sphi 0, %s49
      %s51 = sphi 0, %s49
      %s52 = sphi 0, %s51
      %s66 = sphi 0, %s52
      %s72 = sphi 0, %s74
      %s75 = sphi 0, %s72
      %s76 = sphi 0, %s75
      %s92 = sphi 0, %s76
    $region4: #{tpu_custom_call.1} parent=1 // loop_header_branch
      %18 = sbr.rel (%p16) target = $region8
    $region5: #{tpu_custom_call.1} parent=1 // loop_body
      %s20 = ssub.s32 %s15, 1
      %s21 = ssub.s32 %s15, 2
      %s22 = sadd.s32 %s15, 1
      %s23 = ssub.s32 %s15, %s22
      %p24 = scmp.eq.s32.totalorder %s23, 0
      %s26 = sadd.s32 %s25, 1
      %s27 = scalar_select %p24, %s25, %s26
      %p30 = pneg %p24
      %p31 = scmp.eq.s32.totalorder %s15, 2
      %p32 = por %p30, %p31
      %p33 = scmp.ne.s32.totalorder %s25, %s28
      %p34 = scmp.eq.s32.totalorder %s15, 0
      %p35 = por %p33, %p34
      %p36 = scmp.ne.s32.totalorder %s25, %s28
      %p37 = scmp.eq.s32.totalorder %s20, 2
      %p38 = por %p36, %p37
      %p39 = scmp.ne.s32.totalorder %s28, %s29
      %p40 = scmp.eq.s32.totalorder %s20, 0
      %p41 = por %p39, %p40
      %p42 = scmp.ne.s32.totalorder %s28, %s29
      %p43 = scmp.eq.s32.totalorder %s21, 2
      %p44 = por %p42, %p43
      %p46 = scmp.ne.s32.totalorder %s29, %s45
      %p47 = scmp.eq.s32.totalorder %s21, 0
      %p48 = por %p46, %p47
      %s50 = sadd.s32 %s49, 1
      %p53 = scmp.eq.s32.totalorder %s15, 2
      %p54 = scmp.ne.s32.totalorder %s49, %s51
      %p55 = scmp.eq.s32.totalorder %s15, 0
      %p56 = por %p54, %p55
      %p57 = scmp.ne.s32.totalorder %s49, %s51
      %p58 = scmp.eq.s32.totalorder %s20, 2
      %p59 = por %p57, %p58
      %p60 = scmp.ne.s32.totalorder %s51, %s52
      %p61 = scmp.eq.s32.totalorder %s20, 0
      %p62 = por %p60, %p61
      %p63 = scmp.ne.s32.totalorder %s51, %s52
      %p64 = scmp.eq.s32.totalorder %s21, 2
      %p65 = por %p63, %p64
      %p67 = scmp.ne.s32.totalorder %s52, %s66
      %p68 = scmp.eq.s32.totalorder %s21, 0
      %p69 = por %p67, %p68
      %s70 = ssub.s32 %s15, %s22
      %p71 = scmp.eq.s32.totalorder %s70, 0
      %s73 = sadd.s32 %s72, 1
      %s74 = scalar_select %p71, %s72, %s73
      %p77 = pneg %p71
      %p78 = scmp.eq.s32.totalorder %s15, 2
      %p79 = por %p77, %p78
      %p80 = scmp.ne.s32.totalorder %s72, %s75
      %p81 = scmp.eq.s32.totalorder %s15, 0
      %p82 = por %p80, %p81
      %p83 = scmp.ne.s32.totalorder %s72, %s75
      %p84 = scmp.eq.s32.totalorder %s20, 2
      %p85 = por %p83, %p84
      %p86 = scmp.ne.s32.totalorder %s75, %s76
      %p87 = scmp.eq.s32.totalorder %s20, 0
      %p88 = por %p86, %p87
      %p89 = scmp.ne.s32.totalorder %s75, %s76
      %p90 = scmp.eq.s32.totalorder %s21, 2
      %p91 = por %p89, %p90
      %p93 = scmp.ne.s32.totalorder %s76, %s92
      %p94 = scmp.eq.s32.totalorder %s21, 0
      %p95 = por %p93, %p94
      %p96 = scmp.le.s32.totalorder 1, %s15
      %p97 = scmp.lt.s32.totalorder %s15, 4
      %p98 = pnand %p96, %p97
      %p99 = pneg %p98
      // Predicated region
      $region9: #{tpu_custom_call.1} parent=5 // pred_check
        _
      $region10: #{tpu_custom_call.1} parent=5 // pred_check_branch
        %101 = sbr.rel (%p98) target = $region12
      $region11: #{tpu_custom_call.1} parent=5 // pred_region
        %s102 = ssub.s32 %s15, 1
        // Predicated region
        $region13: #{tpu_custom_call.1} parent=11 // pred_check
          %p103 = pneg %p62
        $region14: #{tpu_custom_call.1} parent=11 // pred_check_branch
          %105 = sbr.rel (%p103) target = $region16
        $region15: #{tpu_custom_call.1} parent=11 // pred_region
          %s107 = ssub.s32 1024, 1024
          %108 = vsyncadd [#allocation6], %s107
          %s109 = sshll.u32 [#allocation5], 4
          %s110 = int_to_ptr.vmem [resolvable:$true] %s109
          %115 = dma.hbm_to_vmem [thread:$0]  %s1, 1024, %s110, [#allocation6], 64, 64, 4
        $region16: #{tpu_custom_call.1} parent=11 // pred_fallthru
          _
      $region12: #{tpu_custom_call.1} parent=5 // pred_fallthru
        _
      %p116 = scmp.lt.s32.totalorder %s15, 3
      // Predicated region
      $region17: #{tpu_custom_call.1} parent=5 // pred_check
        %p117 = pneg %p116
      $region18: #{tpu_custom_call.1} parent=5 // pred_check_branch
        %119 = sbr.rel (%p117) target = $region20
      $region19: #{tpu_custom_call.1} parent=5 // pred_region
        // Predicated region
        $region21: #{tpu_custom_call.1} parent=19 // pred_check
          %p120 = pneg %p35
        $region22: #{tpu_custom_call.1} parent=19 // pred_check_branch
          %122 = sbr.rel (%p120) target = $region24
        $region23: #{tpu_custom_call.1} parent=19 // pred_region
          %s123 = sand.u32 %s25, 1
          %s124 = scalar_lea.sflag [#allocation3], %s123
          %s125 = sand.u32 %s25, 1
          %s126 = smul.addr %s125, 64
          %s127 = scalar_lea.vmem [#allocation2], %s126
          %s128 = smul.u32 16, %s15
          %s130 = ssub.s32 1024, 1024
          %131 = vsyncadd %s124, %s130
          %s132 = smul.addr %s128, 64
          %s133 = scalar_lea.hbm %s0, %s132
          %s134 = sshll.u32 %s127, 4
          %s135 = int_to_ptr.vmem [resolvable:$true] %s134
          %140 = dma.hbm_to_vmem [thread:$0]  %s133, 1024, %s135, %s124, 64, 64, 4
        $region24: #{tpu_custom_call.1} parent=19 // pred_fallthru
          _
      $region20: #{tpu_custom_call.1} parent=5 // pred_fallthru
        _
      %p141 = scmp.le.s32.totalorder 1, %s15
      %p142 = scmp.lt.s32.totalorder %s15, 4
      %p143 = pnand %p141, %p142
      %p144 = pneg %p143
      // Predicated region
      $region25: #{tpu_custom_call.1} parent=5 // pred_check
        _
      $region26: #{tpu_custom_call.1} parent=5 // pred_check_branch
        %146 = sbr.rel (%p143) target = $region28
      $region27: #{tpu_custom_call.1} parent=5 // pred_region
        %s147 = ssub.s32 %s15, 1
        %s148 = sand.u32 %s28, 1
        %s149 = scalar_lea.sflag [#allocation3], %s148
        %s150 = sand.u32 %s28, 1
        %s151 = smul.addr %s150, 64
        %s152 = scalar_lea.vmem [#allocation2], %s151
        // Predicated region
        $region29: #{tpu_custom_call.1} parent=27 // pred_check
          %p153 = pneg %p41
        $region30: #{tpu_custom_call.1} parent=27 // pred_check_branch
          %155 = sbr.rel (%p153) target = $region32
        $region31: #{tpu_custom_call.1} parent=27 // pred_region
          %156 = dma.done %s149, 1024
        $region32: #{tpu_custom_call.1} parent=27 // pred_fallthru
          _
        // Predicated region
        $region33: #{tpu_custom_call.1} parent=27 // pred_check
          %p157 = pneg %p62
        $region34: #{tpu_custom_call.1} parent=27 // pred_check_branch
          %159 = sbr.rel (%p157) target = $region36
        $region35: #{tpu_custom_call.1} parent=27 // pred_region
          %160 = dma.done [#allocation6], 1024
        $region36: #{tpu_custom_call.1} parent=27 // pred_fallthru
          _
        %s161 = sand.u32 %s28, 1
        %s162 = scalar_lea.sflag [#allocation3], %s161
        %s163 = sand.u32 %s28, 1
        %s164 = smul.addr %s163, 64
        %s165 = scalar_lea.vmem [#allocation2], %s164
        %p166 = pneg %p41
        %p167 = pneg %p38
        %p168 = pneg %p62
        %p169 = pneg %p59
        %p170 = pneg %p88
        %p171 = pneg %p85
        %s172 = sand.u32 %s75, 1
        %s173 = scalar_lea.sflag [#allocation4], %s172
        %s174 = sand.u32 %s75, 1
        %s175 = smul.addr %s174, 64
        %s176 = scalar_lea.vmem [#allocation7], %s175
        %s177 = smul.u32 16, %s20
        %s178 = smul.u32 16, %s20
        %v180 = vld [vmem:[%s152] sm:$0xf]
        %v181 = vld [vmem:[%s152 + $0x4] sm:$0xf]
        %v182 = vld [vmem:[%s152 + $0x8] sm:$0xf]
        %v183 = vld [vmem:[%s152 + $0xc] sm:$0xf]
        %v184 = vld [vmem:[%s152 + $0x10] sm:$0xf]
        %v185 = vld [vmem:[%s152 + $0x14] sm:$0xf]
        %v186 = vld [vmem:[%s152 + $0x18] sm:$0xf]
        %v187 = vld [vmem:[%s152 + $0x1c] sm:$0xf]
        %v188 = vld [vmem:[%s152 + $0x20] sm:$0xf]
        %v189 = vld [vmem:[%s152 + $0x24] sm:$0xf]
        %v190 = vld [vmem:[%s152 + $0x28] sm:$0xf]
        %v191 = vld [vmem:[%s152 + $0x2c] sm:$0xf]
        %v192 = vld [vmem:[%s152 + $0x30] sm:$0xf]
        %v193 = vld [vmem:[%s152 + $0x34] sm:$0xf]
        %v194 = vld [vmem:[%s152 + $0x38] sm:$0xf]
        %v195 = vld [vmem:[%s152 + $0x3c] sm:$0xf]
        %v196 = vld [vmem:[#allocation5] sm:$0xf]
        %v197 = vld [vmem:[#allocation5 + $0x4] sm:$0xf]
        %v198 = vld [vmem:[#allocation5 + $0x8] sm:$0xf]
        %v199 = vld [vmem:[#allocation5 + $0xc] sm:$0xf]
        %v200 = vld [vmem:[#allocation5 + $0x10] sm:$0xf]
        %v201 = vld [vmem:[#allocation5 + $0x14] sm:$0xf]
        %v202 = vld [vmem:[#allocation5 + $0x18] sm:$0xf]
        %v203 = vld [vmem:[#allocation5 + $0x1c] sm:$0xf]
        %v204 = vld [vmem:[#allocation5 + $0x20] sm:$0xf]
        %v205 = vld [vmem:[#allocation5 + $0x24] sm:$0xf]
        %v206 = vld [vmem:[#allocation5 + $0x28] sm:$0xf]
        %v207 = vld [vmem:[#allocation5 + $0x2c] sm:$0xf]
        %v208 = vld [vmem:[#allocation5 + $0x30] sm:$0xf]
        %v209 = vld [vmem:[#allocation5 + $0x34] sm:$0xf]
        %v210 = vld [vmem:[#allocation5 + $0x38] sm:$0xf]
        %v211 = vld [vmem:[#allocation5 + $0x3c] sm:$0xf]
        %v228 = vunpack.c.l.b16 %v180
        %v229 = vunpack.c.l.b16 %v181
        %v230 = vunpack.c.l.b16 %v182
        %v231 = vunpack.c.l.b16 %v183
        %v232 = vunpack.c.l.b16 %v184
        %v233 = vunpack.c.l.b16 %v185
        %v234 = vunpack.c.l.b16 %v186
        %v235 = vunpack.c.l.b16 %v187
        %v236 = vunpack.c.l.b16 %v188
        %v237 = vunpack.c.l.b16 %v189
        %v238 = vunpack.c.l.b16 %v190
        %v239 = vunpack.c.l.b16 %v191
        %v240 = vunpack.c.l.b16 %v192
        %v241 = vunpack.c.l.b16 %v193
        %v242 = vunpack.c.l.b16 %v194
        %v243 = vunpack.c.l.b16 %v195
        %v244 = vpack.c.b16 %v229, %v228
        %v245 = vpack.c.b16 %v231, %v230
        %v246 = vpack.c.b16 %v233, %v232
        %v247 = vpack.c.b16 %v235, %v234
        %v248 = vpack.c.b16 %v237, %v236
        %v249 = vpack.c.b16 %v239, %v238
        %v250 = vpack.c.b16 %v241, %v240
        %v251 = vpack.c.b16 %v243, %v242
        %v276 = vunpack.c.l.b16 %v196
        %v277 = vunpack.c.l.b16 %v197
        %v278 = vunpack.c.l.b16 %v198
        %v279 = vunpack.c.l.b16 %v199
        %v280 = vunpack.c.l.b16 %v200
        %v281 = vunpack.c.l.b16 %v201
        %v282 = vunpack.c.l.b16 %v202
        %v283 = vunpack.c.l.b16 %v203
        %v284 = vunpack.c.l.b16 %v204
        %v285 = vunpack.c.l.b16 %v205
        %v286 = vunpack.c.l.b16 %v206
        %v287 = vunpack.c.l.b16 %v207
        %v288 = vunpack.c.l.b16 %v208
        %v289 = vunpack.c.l.b16 %v209
        %v290 = vunpack.c.l.b16 %v210
        %v291 = vunpack.c.l.b16 %v211
        %v292 = vpack.c.b16 %v277, %v276
        %v293 = vpack.c.b16 %v279, %v278
        %v294 = vpack.c.b16 %v281, %v280
        %v295 = vpack.c.b16 %v283, %v282
        %v296 = vpack.c.b16 %v285, %v284
        %v297 = vpack.c.b16 %v287, %v286
        %v298 = vpack.c.b16 %v289, %v288
        %v299 = vpack.c.b16 %v291, %v290
        %308 = vmatprep.subr.bf16.mxu0 0
        %309 = vmatpush1.bf16.msra.mxu0 %v292
        %310 = vmatprep.subr.bf16.mxu0 0
        %311 = vmatpush1.bf16.msra.mxu0 %v293
        %312 = vmatprep.subr.bf16.mxu0 0
        %313 = vmatpush1.bf16.msra.mxu0 %v294
        %314 = vmatprep.subr.bf16.mxu0 0
        %315 = vmatpush1.bf16.msra.mxu0 %v295
        %316 = vmatprep.subr.bf16.mxu0 0
        %317 = vmatpush1.bf16.msra.mxu0 %v296
        %318 = vmatprep.subr.bf16.mxu0 0
        %319 = vmatpush1.bf16.msra.mxu0 %v297
        %320 = vmatprep.subr.bf16.mxu0 0
        %321 = vmatpush1.bf16.msra.mxu0 %v298
        %322 = vmatprep.subr.bf16.mxu0 0
        %323 = vmatpush1.bf16.msra.mxu0 %v299
        %324 = vmatprep.subr.bf16.mxu0 0
        %325 = vmatpush1.bf16.msra.mxu0 0
        %326 = vmatprep.subr.bf16.mxu0 0
        %327 = vmatpush1.bf16.msra.mxu0 0
        %328 = vmatprep.subr.bf16.mxu0 0
        %329 = vmatpush1.bf16.msra.mxu0 0
        %330 = vmatprep.subr.bf16.mxu0 0
        %331 = vmatpush1.bf16.msra.mxu0 0
        %332 = vmatprep.subr.bf16.mxu0 0
        %333 = vmatpush1.bf16.msra.mxu0 0
        %334 = vmatprep.subr.bf16.mxu0 0
        %335 = vmatpush1.bf16.msra.mxu0 0
        %336 = vmatprep.subr.bf16.mxu0 0
        %337 = vmatpush1.bf16.msra.mxu0 0
        %338 = vmatprep.subr.bf16.mxu0 0
        %339 = vmatpush1.bf16.msra.mxu0 0
        %340 = vmatprep.mubr.bf16.mxu0 0
        %341 = vmatmul.mubr.bf16.gmra.mrb[0].mxu0 %v244
        %v342 = vpop.f32.mrb[0].mxu0
        %v343 = vadd.f32 0.0, %v342
        %v344 = vpop.f32.mrb[0].mxu0
        %v345 = vpop.f32.mrb[0].mxu0
        %v346 = vadd.f32 0.0, %v345
        %v347 = vpop.f32.mrb[0].mxu0
        %348 = vmatprep.mubr.bf16.mxu0 0
        %349 = vmatmul.mubr.bf16.gmra.mrb[0].mxu0 %v245
        %v350 = vpop.f32.mrb[0].mxu0
        %v351 = vadd.f32 0.0, %v350
        %v352 = vpop.f32.mrb[0].mxu0
        %v353 = vpop.f32.mrb[0].mxu0
        %v354 = vadd.f32 0.0, %v353
        %v355 = vpop.f32.mrb[0].mxu0
        %356 = vmatprep.mubr.bf16.mxu0 0
        %357 = vmatmul.mubr.bf16.gmra.mrb[0].mxu0 %v246
        %v358 = vpop.f32.mrb[0].mxu0
        %v359 = vadd.f32 0.0, %v358
        %v360 = vpop.f32.mrb[0].mxu0
        %v361 = vpop.f32.mrb[0].mxu0
        %v362 = vadd.f32 0.0, %v361
        %v363 = vpop.f32.mrb[0].mxu0
        %364 = vmatprep.mubr.bf16.mxu0 0
        %365 = vmatmul.mubr.bf16.gmra.mrb[0].mxu0 %v247
        %v366 = vpop.f32.mrb[0].mxu0
        %v367 = vadd.f32 0.0, %v366
        %v368 = vpop.f32.mrb[0].mxu0
        %v369 = vpop.f32.mrb[0].mxu0
        %v370 = vadd.f32 0.0, %v369
        %v371 = vpop.f32.mrb[0].mxu0
        %372 = vmatprep.mubr.bf16.mxu0 0
        %373 = vmatmul.mubr.bf16.gmra.mrb[0].mxu0 %v248
        %v374 = vpop.f32.mrb[0].mxu0
        %v375 = vadd.f32 0.0, %v374
        %v376 = vpop.f32.mrb[0].mxu0
        %v377 = vpop.f32.mrb[0].mxu0
        %v378 = vadd.f32 0.0, %v377
        %v379 = vpop.f32.mrb[0].mxu0
        %380 = vmatprep.mubr.bf16.mxu0 0
        %381 = vmatmul.mubr.bf16.gmra.mrb[0].mxu0 %v249
        %v382 = vpop.f32.mrb[0].mxu0
        %v383 = vadd.f32 0.0, %v382
        %v384 = vpop.f32.mrb[0].mxu0
        %v385 = vpop.f32.mrb[0].mxu0
        %v386 = vadd.f32 0.0, %v385
        %v387 = vpop.f32.mrb[0].mxu0
        %388 = vmatprep.mubr.bf16.mxu0 0
        %389 = vmatmul.mubr.bf16.gmra.mrb[0].mxu0 %v250
        %v390 = vpop.f32.mrb[0].mxu0
        %v391 = vadd.f32 0.0, %v390
        %v392 = vpop.f32.mrb[0].mxu0
        %v393 = vpop.f32.mrb[0].mxu0
        %v394 = vadd.f32 0.0, %v393
        %v395 = vpop.f32.mrb[0].mxu0
        %396 = vmatprep.mubr.bf16.mxu0 0
        %397 = vmatmul.mubr.bf16.gmra.mrb[0].mxu0 %v251
        %v398 = vpop.f32.mrb[0].mxu0
        %v399 = vadd.f32 0.0, %v398
        %v400 = vpop.f32.mrb[0].mxu0
        %v401 = vpop.f32.mrb[0].mxu0
        %v402 = vadd.f32 0.0, %v401
        %v403 = vpop.f32.mrb[0].mxu0
        %404 = vdwg.mxu0
        %v405 = vpack.c.bf16 %v346, %v343
        %v406 = vpack.c.bf16 %v354, %v351
        %v407 = vpack.c.bf16 %v362, %v359
        %v408 = vpack.c.bf16 %v370, %v367
        %v409 = vpack.c.bf16 %v378, %v375
        %v410 = vpack.c.bf16 %v386, %v383
        %v411 = vpack.c.bf16 %v394, %v391
        %v412 = vpack.c.bf16 %v402, %v399
        %v421 = vunpack.c.l.b16 %v405
        %v422 = vunpack.c.h.b16 %v405
        %v423 = vunpack.c.l.b16 %v406
        %v424 = vunpack.c.h.b16 %v406
        %v425 = vunpack.c.l.b16 %v407
        %v426 = vunpack.c.h.b16 %v407
        %v427 = vunpack.c.l.b16 %v408
        %v428 = vunpack.c.h.b16 %v408
        %v429 = vunpack.c.l.b16 %v409
        %v430 = vunpack.c.h.b16 %v409
        %v431 = vunpack.c.l.b16 %v410
        %v432 = vunpack.c.h.b16 %v410
        %v433 = vunpack.c.l.b16 %v411
        %v434 = vunpack.c.h.b16 %v411
        %v435 = vunpack.c.l.b16 %v412
        %v436 = vunpack.c.h.b16 %v412
        %v437 = vpack.c.b16 %v421, %v421
        %v438 = vpack.c.b16 %v422, %v422
        %v439 = vpack.c.b16 %v423, %v423
        %v440 = vpack.c.b16 %v424, %v424
        %v441 = vpack.c.b16 %v425, %v425
        %v442 = vpack.c.b16 %v426, %v426
        %v443 = vpack.c.b16 %v427, %v427
        %v444 = vpack.c.b16 %v428, %v428
        %v445 = vpack.c.b16 %v429, %v429
        %v446 = vpack.c.b16 %v430, %v430
        %v447 = vpack.c.b16 %v431, %v431
        %v448 = vpack.c.b16 %v432, %v432
        %v449 = vpack.c.b16 %v433, %v433
        %v450 = vpack.c.b16 %v434, %v434
        %v451 = vpack.c.b16 %v435, %v435
        %v452 = vpack.c.b16 %v436, %v436
        %469 = vst [vmem:[%s176] sm:$0xf] %v437
        %470 = vst [vmem:[%s176 + $0x4] sm:$0xf] %v438
        %471 = vst [vmem:[%s176 + $0x8] sm:$0xf] %v439
        %472 = vst [vmem:[%s176 + $0xc] sm:$0xf] %v440
        %473 = vst [vmem:[%s176 + $0x10] sm:$0xf] %v441
        %474 = vst [vmem:[%s176 + $0x14] sm:$0xf] %v442
        %475 = vst [vmem:[%s176 + $0x18] sm:$0xf] %v443
        %476 = vst [vmem:[%s176 + $0x1c] sm:$0xf] %v444
        %477 = vst [vmem:[%s176 + $0x20] sm:$0xf] %v445
        %478 = vst [vmem:[%s176 + $0x24] sm:$0xf] %v446
        %479 = vst [vmem:[%s176 + $0x28] sm:$0xf] %v447
        %480 = vst [vmem:[%s176 + $0x2c] sm:$0xf] %v448
        %481 = vst [vmem:[%s176 + $0x30] sm:$0xf] %v449
        %482 = vst [vmem:[%s176 + $0x34] sm:$0xf] %v450
        %483 = vst [vmem:[%s176 + $0x38] sm:$0xf] %v451
        %484 = vst [vmem:[%s176 + $0x3c] sm:$0xf] %v452
        %s485 = sand.u32 %s75, 1
        %s486 = scalar_lea.sflag [#allocation4], %s485
        %s487 = sand.u32 %s75, 1
        %s488 = smul.addr %s487, 64
        %s489 = scalar_lea.vmem [#allocation7], %s488
        // Predicated region
        $region37: #{tpu_custom_call.1} parent=27 // pred_check
          %p490 = pneg %p85
        $region38: #{tpu_custom_call.1} parent=27 // pred_check_branch
          %492 = sbr.rel (%p490) target = $region40
        $region39: #{tpu_custom_call.1} parent=27 // pred_region
          %s493 = smul.u32 16, %s20
          %s495 = ssub.s32 1024, 1024
          %496 = vsyncadd %s486, %s495
          %s497 = smul.addr %s493, 64
          %s498 = scalar_lea.hbm %s2, %s497
          %s499 = sshll.u32 %s489, 4
          %s500 = int_to_ptr.vmem [resolvable:$true] %s499
          %505 = dma.vmem_to_hbm [thread:$0]  %s500, 1024, %s498, %s486, 64, 64, 4
        $region40: #{tpu_custom_call.1} parent=27 // pred_fallthru
          _
      $region28: #{tpu_custom_call.1} parent=5 // pred_fallthru
        _
      %p506 = scmp.le.s32.totalorder 2, %s15
      // Predicated region
      $region41: #{tpu_custom_call.1} parent=5 // pred_check
        %p507 = pneg %p506
      $region42: #{tpu_custom_call.1} parent=5 // pred_check_branch
        %509 = sbr.rel (%p507) target = $region44
      $region43: #{tpu_custom_call.1} parent=5 // pred_region
        %s510 = ssub.s32 %s15, 2
        // Predicated region
        $region45: #{tpu_custom_call.1} parent=43 // pred_check
          %p511 = pneg %p91
        $region46: #{tpu_custom_call.1} parent=43 // pred_check_branch
          %513 = sbr.rel (%p511) target = $region48
        $region47: #{tpu_custom_call.1} parent=43 // pred_region
          %s514 = sand.u32 %s76, 1
          %s515 = scalar_lea.sflag [#allocation4], %s514
          %s516 = sand.u32 %s76, 1
          %s517 = smul.addr %s516, 64
          %s518 = scalar_lea.vmem [#allocation7], %s517
          %519 = dma.done %s515, 1024
        $region48: #{tpu_custom_call.1} parent=43 // pred_fallthru
          _
      $region44: #{tpu_custom_call.1} parent=5 // pred_fallthru
        _
    $region6: #{tpu_custom_call.1} parent=1 // loop_footer
      %s19 = sadd.s32 1, %s15
    $region7: #{tpu_custom_call.1} parent=1 // loop_footer_branch
      %14 = sbr.rel target = $region3
    $region8: #{tpu_custom_call.1} parent=1 // loop_exit
      _
    %520 = vsyncpa [#allocation3], 1
    %s521 = scalar_lea.sflag [#allocation3], 1
    %522 = vsyncpa %s521, 1
    %523 = vsyncpa [#allocation6], 1
    %524 = vsyncpa [#allocation4], 1
    %s525 = scalar_lea.sflag [#allocation4], 1
    %526 = vsyncpa %s525, 1

</llo_original>
